<compile_context>
chip_gen: v7x
topology: tpu7x:2x2x1
jax: 0.10.0
libtpu: 0.0.40
codegen_flags: <defaults>
</compile_context>

<pallas_src>
import functools
import jax
import jax.numpy as jnp
from jax.experimental import pallas as pl
from jax.experimental.pallas import tpu as pltpu

VMEM_LIMIT = 32 * 1024 * 1024   # safe on v5e/v6e (128 MiB phys) and v7x (64 MiB phys)


def _round_up(n, m):
    return -(-n // m) * m


def _pick_tile(n, cap=256):
    # pixel-tile size: multiple of 8 sublanes, capped for VMEM double-buffering
    return min(cap, _round_up(n, 8))


# -----------------------------------------------------------------------------
# Pallas kernels
# -----------------------------------------------------------------------------
def _pw_kernel(x_ref, w_ref, scale_ref, shift_ref, o_ref, *, act):
    # pointwise (1x1) conv as matmul over a tile of flattened pixels + folded BN (+ SiLU)
    y = jnp.dot(x_ref[...], w_ref[...], preferred_element_type=jnp.float32)
    y = y * scale_ref[...].astype(jnp.float32) + shift_ref[...].astype(jnp.float32)
    if act:
        y = y * jax.nn.sigmoid(y)                        # SiLU
    o_ref[...] = y.astype(o_ref.dtype)


def _dw_kernel(*args, k, stride, n_phase):
    # depthwise kxk conv (stride applied directly via pre-split phases) + folded BN + SiLU
    # also emits the per-(batch, channel) spatial sum for the SE block (fused pooling).
    phase_refs = args[:n_phase]
    w_ref, scale_ref, shift_ref, y_ref, pool_ref = args[n_phase:]
    _, Ho, Wo, _ = y_ref.shape
    w = w_ref[...].astype(jnp.float32)                   # (k*k, TC)
    acc = jnp.zeros(y_ref.shape, jnp.float32)            # (1, Ho, Wo, TC)
    for di in range(k):
        pi, qi = di % stride, di // stride
        for dj in range(k):
            pj, qj = dj % stride, dj // stride
            ph = phase_refs[pi * stride + pj]
            xsl = ph[:, qi:qi + Ho, qj:qj + Wo, :].astype(jnp.float32)
            acc = acc + xsl * w[di * k + dj]             # (TC,) broadcast over lanes
    y = acc * scale_ref[...].astype(jnp.float32) + shift_ref[...].astype(jnp.float32)
    y = y * jax.nn.sigmoid(y)                            # SiLU
    y_ref[...] = y.astype(y_ref.dtype)
    pool_ref[...] = jnp.sum(y, axis=(1, 2))[:, None, :]  # (1, 1, TC) spatial sum (f32)


def _se_fc_kernel(p_ref, w1_ref, b1_ref, w2_ref, b2_ref, o_ref, *, inv_s):
    # Squeeze-Excite FCs only (pooling sum already produced by the dw kernel).
    p = p_ref[...][:, 0, :].astype(jnp.float32) * inv_s  # mean via 1/S multiply
    s = jnp.dot(p, w1_ref[...], preferred_element_type=jnp.float32) + b1_ref[...]
    s = s * jax.nn.sigmoid(s)                            # SiLU
    e = jax.nn.sigmoid(
        jnp.dot(s, w2_ref[...], preferred_element_type=jnp.float32) + b2_ref[...])
    o_ref[...] = e[:, None, :]                           # (B, 1, Cmid) excite, f32


def _proj_kernel(x_ref, e_ref, w_ref, scale_ref, shift_ref, *rest, has_res):
    # projection 1x1 conv with fused SE channel-scale, folded BN and (optional) residual.
    if has_res:
        sc_ref, o_ref = rest
    else:
        (o_ref,) = rest
    x = x_ref[0].astype(jnp.float32) * e_ref[0].astype(jnp.float32)   # SE scale fused
    y = jnp.dot(x.astype(w_ref.dtype), w_ref[...], preferred_element_type=jnp.float32)
    y = y * scale_ref[...].astype(jnp.float32) + shift_ref[...].astype(jnp.float32)
    if has_res:
        y = y + sc_ref[0].astype(jnp.float32)            # residual fused
    o_ref[0] = y.astype(o_ref.dtype)


def _head_kernel(x_ref, w_ref, b_ref, o_ref, *, inv_s):
    # global average pool (1/S multiply) + Linear(1280, num_classes)
    x = x_ref[...].astype(jnp.float32)                   # (B, S, 1280)
    pooled = jnp.sum(x, axis=1) * inv_s                  # (B, 1280)
    y = jnp.dot(pooled, w_ref[...], preferred_element_type=jnp.float32) + b_ref[...]
    o_ref[...] = y.astype(o_ref.dtype)


# -----------------------------------------------------------------------------
# Pallas wrappers
# -----------------------------------------------------------------------------
def pointwise_conv_bn(x2d, w, scale, shift, act=True, out_dtype=jnp.bfloat16):
    N, Cin = x2d.shape
    Cout = w.shape[1]
    TM = _pick_tile(N)
    Np = _round_up(N, TM)
    if Np != N:
        x2d = jnp.pad(x2d, ((0, Np - N), (0, 0)))
    y = pl.pallas_call(
        functools.partial(_pw_kernel, act=act),
        out_shape=jax.ShapeDtypeStruct((Np, Cout), out_dtype),
        grid=(Np // TM,),
        in_specs=[pl.BlockSpec((TM, Cin), lambda i: (i, 0)),
                  pl.BlockSpec((Cin, Cout), lambda i: (0, 0)),
                  pl.BlockSpec((1, Cout), lambda i: (0, 0)),
                  pl.BlockSpec((1, Cout), lambda i: (0, 0))],
        out_specs=pl.BlockSpec((TM, Cout), lambda i: (i, 0)),
        compiler_params=pltpu.CompilerParams(
            dimension_semantics=("parallel",), vmem_limit_bytes=VMEM_LIMIT),
    )(x2d, w, scale.reshape(1, -1), shift.reshape(1, -1))
    return y[:N]


def pw_conv(x_nhwc, w, scale, shift, act=True):
    B, H, W, Cin = x_nhwc.shape
    Cout = w.shape[1]
    y = pointwise_conv_bn(x_nhwc.reshape(B * H * W, Cin), w, scale, shift, act)
    return y.reshape(B, H, W, Cout)


def dw_conv(x_nhwc, w, scale, shift, stride, k):
    # depthwise conv + BN + SiLU, stride computed directly; also returns the spatial
    # sum of the activated output (for SE) as (B, 1, C) f32.
    B, H, W, C = x_nhwc.shape
    pad = k // 2
    xp = jnp.pad(x_nhwc, ((0, 0), (pad, pad), (pad, pad), (0, 0)))
    Hp, Wp = H + 2 * pad, W + 2 * pad
    Ho = (Hp - k) // stride + 1
    Wo = (Wp - k) // stride + 1
    if stride == 1:
        phases = [xp]
    else:
        # split into stride x stride phase sub-images (glue) so the kernel only does
        # stride-1 window slices -> no wasted taps, 1/stride^2-sized output writeback.
        phases = [xp[:, pi::stride, pj::stride, :]
                  for pi in range(stride) for pj in range(stride)]
    n_phase = len(phases)
    TC = 128 if C % 128 == 0 else C          # 128-lane channel chunks when divisible
    nchunks = C // TC
    w2d = w.reshape(k * k, C)

    phase_specs = [pl.BlockSpec((1, ph.shape[1], ph.shape[2], TC),
                                lambda b, c: (b, 0, 0, c)) for ph in phases]
    y, pooled = pl.pallas_call(
        functools.partial(_dw_kernel, k=k, stride=stride, n_phase=n_phase),
        out_shape=(jax.ShapeDtypeStruct((B, Ho, Wo, C), jnp.bfloat16),
                   jax.ShapeDtypeStruct((B, 1, C), jnp.float32)),
        grid=(B, nchunks),
        in_specs=phase_specs + [
            pl.BlockSpec((k * k, TC), lambda b, c: (0, c)),
            pl.BlockSpec((1, TC), lambda b, c: (0, c)),
            pl.BlockSpec((1, TC), lambda b, c: (0, c)),
        ],
        out_specs=(pl.BlockSpec((1, Ho, Wo, TC), lambda b, c: (b, 0, 0, c)),
                   pl.BlockSpec((1, 1, TC), lambda b, c: (b, 0, c))),
        compiler_params=pltpu.CompilerParams(
            dimension_semantics=("parallel", "parallel"), vmem_limit_bytes=VMEM_LIMIT),
    )(*(phases + [w2d, scale.reshape(1, -1), shift.reshape(1, -1)]))
    return y, pooled


def se_fc(pooled_sum, w1, b1, w2, b2, inv_s):
    B, _, C = pooled_sum.shape
    rd = w1.shape[1]
    return pl.pallas_call(
        functools.partial(_se_fc_kernel, inv_s=inv_s),
        out_shape=jax.ShapeDtypeStruct((B, 1, C), jnp.float32),
        grid=(1,),
        in_specs=[pl.BlockSpec((B, 1, C), lambda i: (0, 0, 0)),
                  pl.BlockSpec((C, rd), lambda i: (0, 0)),
                  pl.BlockSpec((1, rd), lambda i: (0, 0)),
                  pl.BlockSpec((rd, C), lambda i: (0, 0)),
                  pl.BlockSpec((1, C), lambda i: (0, 0))],
        out_specs=pl.BlockSpec((B, 1, C), lambda i: (0, 0, 0)),
        compiler_params=pltpu.CompilerParams(
            dimension_semantics=("arbitrary",), vmem_limit_bytes=VMEM_LIMIT),
    )(pooled_sum, w1, b1.reshape(1, -1), w2, b2.reshape(1, -1))


def proj_conv_fused(x_nhwc, excite, w, scale, shift, shortcut=None):
    # 1x1 projection conv with fused SE scale and residual; gridded over (batch, pixel tiles)
    B, H, W, Cmid = x_nhwc.shape
    Cout = w.shape[1]
    S = H * W
    TS = _pick_tile(S)
    Sp = _round_up(S, TS)
    x3 = x_nhwc.reshape(B, S, Cmid)
    if Sp != S:
        x3 = jnp.pad(x3, ((0, 0), (0, Sp - S), (0, 0)))
    ins = [x3, excite, w, scale.reshape(1, -1), shift.reshape(1, -1)]
    in_specs = [pl.BlockSpec((1, TS, Cmid), lambda b, s: (b, s, 0)),
                pl.BlockSpec((1, 1, Cmid), lambda b, s: (b, 0, 0)),
                pl.BlockSpec((Cmid, Cout), lambda b, s: (0, 0)),
                pl.BlockSpec((1, Cout), lambda b, s: (0, 0)),
                pl.BlockSpec((1, Cout), lambda b, s: (0, 0))]
    has_res = shortcut is not None
    if has_res:
        sc3 = shortcut.reshape(B, S, Cout)
        if Sp != S:
            sc3 = jnp.pad(sc3, ((0, 0), (0, Sp - S), (0, 0)))
        ins.append(sc3)
        in_specs.append(pl.BlockSpec((1, TS, Cout), lambda b, s: (b, s, 0)))
    y = pl.pallas_call(
        functools.partial(_proj_kernel, has_res=has_res),
        out_shape=jax.ShapeDtypeStruct((B, Sp, Cout), jnp.bfloat16),
        grid=(B, Sp // TS),
        in_specs=in_specs,
        out_specs=pl.BlockSpec((1, TS, Cout), lambda b, s: (b, s, 0)),
        compiler_params=pltpu.CompilerParams(
            dimension_semantics=("parallel", "parallel"), vmem_limit_bytes=VMEM_LIMIT),
    )(*ins)
    return y[:, :S, :].reshape(B, H, W, Cout)


def head_pool_classify(x3, w, b):
    B, S, C = x3.shape
    nc = w.shape[1]
    return pl.pallas_call(
        functools.partial(_head_kernel, inv_s=1.0 / S),
        out_shape=jax.ShapeDtypeStruct((B, nc), jnp.float32),
        grid=(1,),
        in_specs=[pl.BlockSpec((B, S, C), lambda i: (0, 0, 0)),
                  pl.BlockSpec((C, nc), lambda i: (0, 0)),
                  pl.BlockSpec((1, nc), lambda i: (0, 0))],
        out_specs=pl.BlockSpec((B, nc), lambda i: (0, 0)),
        compiler_params=pltpu.CompilerParams(
            dimension_semantics=("arbitrary",), vmem_limit_bytes=VMEM_LIMIT),
    )(x3, w, b.reshape(1, -1))


# -----------------------------------------------------------------------------
# Glue: im2col for the stem conv (stride-2 3x3, cin=3)
# -----------------------------------------------------------------------------
def im2col(x, k, stride, pad):
    x = jnp.pad(x, ((0, 0), (pad, pad), (pad, pad), (0, 0)))
    B, Hp, Wp, C = x.shape
    Ho = (Hp - k) // stride + 1
    Wo = (Wp - k) // stride + 1
    patches = []
    for di in range(k):
        for dj in range(k):
            patches.append(
                x[:, di:di + stride * (Ho - 1) + 1:stride,
                  dj:dj + stride * (Wo - 1) + 1:stride, :])
    return jnp.concatenate(patches, axis=-1)   # (B, Ho, Wo, k*k*C)


# -----------------------------------------------------------------------------
# Parameter init (deterministic, synthetic) -- EfficientNet-B0 architecture
# -----------------------------------------------------------------------------
# (expand_ratio, kernel, first_stride, out_channels, num_blocks)
B0_CFG = [
    (1, 3, 1, 16, 1),
    (6, 3, 2, 24, 2),
    (6, 5, 2, 40, 2),
    (6, 3, 2, 80, 3),
    (6, 5, 1, 112, 3),
    (6, 5, 2, 192, 4),
    (6, 3, 1, 320, 1),
]


def _fold_bn(key, c, eps=1e-5):
    k1, k2, k3, k4 = jax.random.split(key, 4)
    gamma = jax.random.uniform(k1, (c,), jnp.float32, 0.5, 1.5)
    beta = jax.random.normal(k2, (c,), jnp.float32) * 0.1
    mean = jax.random.normal(k3, (c,), jnp.float32) * 0.1
    var = jax.random.uniform(k4, (c,), jnp.float32, 0.5, 1.5)
    scale = gamma / jnp.sqrt(var + eps)
    shift = beta - mean * scale
    return scale, shift


def _conv_w(key, cin, cout, dtype=jnp.bfloat16):
    return (jax.random.normal(key, (cin, cout), jnp.float32)
            / jnp.sqrt(float(cin))).astype(dtype)


def _dw_w(key, k, c):
    return (jax.random.normal(key, (k, k, c), jnp.float32) / float(k)).astype(jnp.bfloat16)


def init_params(key, num_classes=4):
    keys = iter(jax.random.split(key, 256))
    nk = lambda: next(keys)
    params = {}
    params['stem_w'] = _conv_w(nk(), 3 * 3 * 3, 32)
    params['stem_s'], params['stem_b'] = _fold_bn(nk(), 32)

    blocks, block_cfg = [], []
    cin = 32
    for (e, k, s, cout, n) in B0_CFG:
        for i in range(n):
            stride = s if i == 0 else 1
            mid = cin * e
            rd = max(1, int(cin * 0.25))       # SE reduce channels
            p = {}
            if e != 1:
                p['w_exp'] = _conv_w(nk(), cin, mid)
                p['s_exp'], p['b_exp'] = _fold_bn(nk(), mid)
            p['w_dw'] = _dw_w(nk(), k, mid)
            p['s_dw'], p['b_dw'] = _fold_bn(nk(), mid)
            p['w_se1'] = _conv_w(nk(), mid, rd, dtype=jnp.float32)
            p['b_se1'] = jnp.zeros((rd,), jnp.float32)
            p['w_se2'] = _conv_w(nk(), rd, mid, dtype=jnp.float32)
            p['b_se2'] = jnp.zeros((mid,), jnp.float32)
            p['w_proj'] = _conv_w(nk(), mid, cout)
            p['s_proj'], p['b_proj'] = _fold_bn(nk(), cout)
            blocks.append(p)
            block_cfg.append((e, k, stride, cin, cout))
            cin = cout
    params['blocks'] = blocks
    params['head_w'] = _conv_w(nk(), 320, 1280)
    params['head_s'], params['head_b'] = _fold_bn(nk(), 1280)
    params['cls_w'] = _conv_w(nk(), 1280, num_classes, dtype=jnp.float32)
    params['cls_b'] = jnp.zeros((num_classes,), jnp.float32)
    return params, block_cfg


# -----------------------------------------------------------------------------
# Forward pass (matches TrashClassifier.forward)
# -----------------------------------------------------------------------------
def mbconv(x, p, expand, k, stride, cin, cout):
    shortcut = x if (stride == 1 and cin == cout) else None
    h = x
    if expand != 1:
        h = pw_conv(h, p['w_exp'], p['s_exp'], p['b_exp'], act=True)
    h, pooled = dw_conv(h, p['w_dw'], p['s_dw'], p['b_dw'], stride, k)
    inv_s = 1.0 / float(h.shape[1] * h.shape[2])
    excite = se_fc(pooled, p['w_se1'], p['b_se1'], p['w_se2'], p['b_se2'], inv_s)
    return proj_conv_fused(h, excite, p['w_proj'], p['s_proj'], p['b_proj'], shortcut)


def trash_classifier_forward(x_nchw, params, block_cfg):
    x = jnp.transpose(x_nchw, (0, 2, 3, 1)).astype(jnp.bfloat16)   # NCHW -> NHWC
    # stem: 3x3 stride-2 conv (3->32) + BN + SiLU (im2col glue + gridded Pallas matmul)
    cols = im2col(x, k=3, stride=2, pad=1)
    B, Ho, Wo, KC = cols.shape
    x = pointwise_conv_bn(cols.reshape(B * Ho * Wo, KC),
                          params['stem_w'], params['stem_s'], params['stem_b'],
                          act=True).reshape(B, Ho, Wo, 32)
    # MBConv stack (16 blocks)
    for p, (e, k, s, cin, cout) in zip(params['blocks'], block_cfg):
        x = mbconv(x, p, e, k, s, cin, cout)
    # conv_head (1x1, 320->1280) + BN + SiLU
    x = pw_conv(x, params['head_w'], params['head_s'], params['head_b'], act=True)
    # global avg pool + classifier Linear(1280, num_classes)
    B, H, W, C = x.shape
    logits = head_pool_classify(x.reshape(B, H * W, C), params['cls_w'], params['cls_b'])
    return logits


# -----------------------------------------------------------------------------
if __name__ == "__main__":
    key = jax.random.PRNGKey(0)
    k_params, k_input = jax.random.split(key)
    params, block_cfg = init_params(k_params, num_classes=4)

    x = jax.random.normal(k_input, (2, 3, 32, 32), jnp.float32)   # NCHW like PyTorch

    logits = trash_classifier_forward(x, params, block_cfg)
    logits = jax.block_until_ready(logits)

    assert logits.shape == (2, 4), logits.shape
    assert jnp.all(jnp.isfinite(logits))
    print("KERNEL_OK")
</pallas_src>

<mosaic_0001>
module attributes {stable_mosaic.version = 11 : i64} {
  func.func @_pw_kernel(%arg0: i32, %arg1: memref<256x27xbf16, #tpu.memory_space<vmem>>, %arg2: memref<27x32xbf16, #tpu.memory_space<vmem>>, %arg3: memref<1x32xf32, #tpu.memory_space<vmem>>, %arg4: memref<1x32xf32, #tpu.memory_space<vmem>>, %arg5: memref<256x32xbf16, #tpu.memory_space<vmem>>) attributes {dimension_semantics = [#tpu.dimension_semantics<parallel>], iteration_bounds = array<i64: 2>, scalar_prefetch = 0 : i64, scratch_operands = 0 : i64, tpu.core_type = #tpu.core_type<tc>, window_params = [{transform_indices = @transform_0, window_bounds = array<i64: 256, 27>}, {pipeline_mode = #tpu.pipeline_mode<synchronous>, transform_indices = @transform_1, window_bounds = array<i64: 27, 32>}, {pipeline_mode = #tpu.pipeline_mode<synchronous>, transform_indices = @transform_2, window_bounds = array<i64: 1, 32>}, {pipeline_mode = #tpu.pipeline_mode<synchronous>, transform_indices = @transform_3, window_bounds = array<i64: 1, 32>}, {transform_indices = @transform_4, window_bounds = array<i64: 256, 32>}]} {
    %c0 = arith.constant 0 : index
    %c0_0 = arith.constant 0 : index
    %0 = vector.load %arg1[%c0, %c0_0] : memref<256x27xbf16, #tpu.memory_space<vmem>>, vector<256x27xbf16>
    %c0_1 = arith.constant 0 : index
    %c0_2 = arith.constant 0 : index
    %1 = vector.load %arg2[%c0_1, %c0_2] : memref<27x32xbf16, #tpu.memory_space<vmem>>, vector<27x32xbf16>
    %cst = arith.constant dense<0.000000e+00> : vector<256x32xf32>
    %2 = tpu.matmul %0, %1, %cst {dimension_numbers = #tpu.dot_dimension_numbers<[1], [0], [0], [1], [0, 0, 1, 1], [], []>} : vector<256x27xbf16>, vector<27x32xbf16>, vector<256x32xf32> -> vector<256x32xf32>
    %c0_3 = arith.constant 0 : index
    %c0_4 = arith.constant 0 : index
    %3 = vector.load %arg3[%c0_3, %c0_4] : memref<1x32xf32, #tpu.memory_space<vmem>>, vector<1x32xf32>
    %4 = vector.broadcast %3 : vector<1x32xf32> to vector<256x32xf32>
    %5 = arith.mulf %2, %4 : vector<256x32xf32>
    %c0_5 = arith.constant 0 : index
    %c0_6 = arith.constant 0 : index
    %6 = vector.load %arg4[%c0_5, %c0_6] : memref<1x32xf32, #tpu.memory_space<vmem>>, vector<1x32xf32>
    %7 = vector.broadcast %6 : vector<1x32xf32> to vector<256x32xf32>
    %8 = arith.addf %5, %7 : vector<256x32xf32>
    %9 = arith.negf %8 : vector<256x32xf32>
    %10 = math.exp %9 : vector<256x32xf32>
    %cst_7 = arith.constant 1.000000e+00 : f32
    %11 = vector.broadcast %cst_7 : f32 to vector<256x32xf32>
    %12 = arith.addf %11, %10 : vector<256x32xf32>
    %13 = arith.divf %11, %12 : vector<256x32xf32>
    %14 = arith.mulf %8, %13 : vector<256x32xf32>
    %15 = arith.truncf %14 : vector<256x32xf32> to vector<256x32xbf16>
    %c0_8 = arith.constant 0 : index
    %c0_9 = arith.constant 0 : index
    %16 = vector.load %arg5[%c0_8, %c0_9] : memref<256x32xbf16, #tpu.memory_space<vmem>>, vector<256x32xbf16>
    tpu.vector_store %arg5[%c0_8, %c0_9], %15 {strides = array<i32>} : memref<256x32xbf16, #tpu.memory_space<vmem>>, vector<256x32xbf16>,
    return
  }
  func.func @transform_0(%arg0: i32) -> (i32, i32) {
    %c0_i32 = arith.constant 0 : i32
    %c0_i32_0 = arith.constant 0 : i32
    return %arg0, %c0_i32 : i32, i32
  }
  func.func @transform_1(%arg0: i32) -> (i32, i32) {
    %c0_i32 = arith.constant 0 : i32
    %c0_i32_0 = arith.constant 0 : i32
    %c0_i32_1 = arith.constant 0 : i32
    return %c0_i32, %c0_i32_0 : i32, i32
  }
  func.func @transform_2(%arg0: i32) -> (i32, i32) {
    %c0_i32 = arith.constant 0 : i32
    %c0_i32_0 = arith.constant 0 : i32
    %c0_i32_1 = arith.constant 0 : i32
    return %c0_i32, %c0_i32_0 : i32, i32
  }
  func.func @transform_3(%arg0: i32) -> (i32, i32) {
    %c0_i32 = arith.constant 0 : i32
    %c0_i32_0 = arith.constant 0 : i32
    %c0_i32_1 = arith.constant 0 : i32
    return %c0_i32, %c0_i32_0 : i32, i32
  }
  func.func @transform_4(%arg0: i32) -> (i32, i32) {
    %c0_i32 = arith.constant 0 : i32
    %c0_i32_0 = arith.constant 0 : i32
    return %arg0, %c0_i32 : i32, i32
  }
}

</mosaic_0001>

<llo_original>
// kernel: tpu_custom_call.1
$region0: #{tpu_custom_call.1}
  #allocation0 [shape = 'u32[]', space=smem, size = 0x4, offset = 0x4, fixed_abs, tag = 'smem constant byte address 0x4 - core index']
  #allocation1 [shape = 'u32[144,128]{1,0:T(1,128)}', space=vmem, size = 0x12000, scoped, tag = 'internal scratch']
  %s0 = inlined_call_operand.vmem [shape: bf16[512,27], index: 0, kind: input, shape index: {}]
  %s1 = inlined_call_operand.vmem [shape: bf16[27,32], index: 1, kind: input, shape index: {}]
  %s2 = inlined_call_operand.vmem [shape: f32[1,32], index: 2, kind: input, shape index: {}]
  %s3 = inlined_call_operand.vmem [shape: f32[1,32], index: 3, kind: input, shape index: {}]
  %s4 = inlined_call_operand.vmem [shape: bf16[512,32], index: 4, kind: output, shape index: {}]
  %s5 = sld [smem:[#allocation0]]
  $region49: #{tpu_custom_call.1} parent=0
    _
  %s7 = ssub.s32 1, %s5
  %s8 = scalar_select 0, %s7, %s5
  loop: start=0, step=1, limit=4
  $region2: #{tpu_custom_call.1} parent=0 // loop_pre_header
    _
  $region3: #{tpu_custom_call.1} parent=0 // loop_header
    %s10 = sphi 0, %s14
    %p11 = scmp.ge.s32.totalorder %s10, 4
    %s20 = sphi 0, %s22
    %s23 = sphi 0, %s20
    %s24 = sphi 0, %s23
    %s40 = sphi 0, %s24
    %s44 = sphi 0, %s44
    %s46 = sphi 0, %s44
    %s47 = sphi 0, %s46
    %s61 = sphi 0, %s47
    %s65 = sphi 0, %s65
    %s67 = sphi 0, %s65
    %s68 = sphi 0, %s67
    %s82 = sphi 0, %s68
    %s86 = sphi 0, %s86
    %s88 = sphi 0, %s86
    %s89 = sphi 0, %s88
    %s103 = sphi 0, %s89
    %s109 = sphi 0, %s111
    %s112 = sphi 0, %s109
    %s113 = sphi 0, %s112
    %s129 = sphi 0, %s113
  $region4: #{tpu_custom_call.1} parent=0 // loop_header_branch
    %13 = sbr.rel (%p11) target = $region8
  $region5: #{tpu_custom_call.1} parent=0 // loop_body
    %s15 = ssub.s32 %s10, 1
    %s16 = ssub.s32 %s10, 2
    %s17 = sadd.s32 %s10, 1
    %s18 = ssub.s32 %s10, %s17
    %p19 = scmp.eq.s32.totalorder %s18, 0
    %s21 = sadd.s32 %s20, 1
    %s22 = scalar_select %p19, %s20, %s21
    %p25 = pneg %p19
    %p26 = scmp.eq.s32.totalorder %s10, 1
    %p27 = por %p25, %p26
    %p28 = scmp.ne.s32.totalorder %s20, %s23
    %p29 = scmp.eq.s32.totalorder %s10, 0
    %p30 = por %p28, %p29
    %p31 = scmp.ne.s32.totalorder %s20, %s23
    %p32 = scmp.eq.s32.totalorder %s15, 1
    %p33 = por %p31, %p32
    %p34 = scmp.ne.s32.totalorder %s23, %s24
    %p35 = scmp.eq.s32.totalorder %s15, 0
    %p36 = por %p34, %p35
    %p37 = scmp.ne.s32.totalorder %s23, %s24
    %p38 = scmp.eq.s32.totalorder %s16, 1
    %p39 = por %p37, %p38
    %p41 = scmp.ne.s32.totalorder %s24, %s40
    %p42 = scmp.eq.s32.totalorder %s16, 0
    %p43 = por %p41, %p42
    %s45 = sadd.s32 %s44, 1
    %p48 = scmp.eq.s32.totalorder %s10, 1
    %p49 = scmp.ne.s32.totalorder %s44, %s46
    %p50 = scmp.eq.s32.totalorder %s10, 0
    %p51 = por %p49, %p50
    %p52 = scmp.ne.s32.totalorder %s44, %s46
    %p53 = scmp.eq.s32.totalorder %s15, 1
    %p54 = por %p52, %p53
    %p55 = scmp.ne.s32.totalorder %s46, %s47
    %p56 = scmp.eq.s32.totalorder %s15, 0
    %p57 = por %p55, %p56
    %p58 = scmp.ne.s32.totalorder %s46, %s47
    %p59 = scmp.eq.s32.totalorder %s16, 1
    %p60 = por %p58, %p59
    %p62 = scmp.ne.s32.totalorder %s47, %s61
    %p63 = scmp.eq.s32.totalorder %s16, 0
    %p64 = por %p62, %p63
    %s66 = sadd.s32 %s65, 1
    %p69 = scmp.eq.s32.totalorder %s10, 1
    %p70 = scmp.ne.s32.totalorder %s65, %s67
    %p71 = scmp.eq.s32.totalorder %s10, 0
    %p72 = por %p70, %p71
    %p73 = scmp.ne.s32.totalorder %s65, %s67
    %p74 = scmp.eq.s32.totalorder %s15, 1
    %p75 = por %p73, %p74
    %p76 = scmp.ne.s32.totalorder %s67, %s68
    %p77 = scmp.eq.s32.totalorder %s15, 0
    %p78 = por %p76, %p77
    %p79 = scmp.ne.s32.totalorder %s67, %s68
    %p80 = scmp.eq.s32.totalorder %s16, 1
    %p81 = por %p79, %p80
    %p83 = scmp.ne.s32.totalorder %s68, %s82
    %p84 = scmp.eq.s32.totalorder %s16, 0
    %p85 = por %p83, %p84
    %s87 = sadd.s32 %s86, 1
    %p90 = scmp.eq.s32.totalorder %s10, 1
    %p91 = scmp.ne.s32.totalorder %s86, %s88
    %p92 = scmp.eq.s32.totalorder %s10, 0
    %p93 = por %p91, %p92
    %p94 = scmp.ne.s32.totalorder %s86, %s88
    %p95 = scmp.eq.s32.totalorder %s15, 1
    %p96 = por %p94, %p95
    %p97 = scmp.ne.s32.totalorder %s88, %s89
    %p98 = scmp.eq.s32.totalorder %s15, 0
    %p99 = por %p97, %p98
    %p100 = scmp.ne.s32.totalorder %s88, %s89
    %p101 = scmp.eq.s32.totalorder %s16, 1
    %p102 = por %p100, %p101
    %p104 = scmp.ne.s32.totalorder %s89, %s103
    %p105 = scmp.eq.s32.totalorder %s16, 0
    %p106 = por %p104, %p105
    %s107 = ssub.s32 %s10, %s17
    %p108 = scmp.eq.s32.totalorder %s107, 0
    %s110 = sadd.s32 %s109, 1
    %s111 = scalar_select %p108, %s109, %s110
    %p114 = pneg %p108
    %p115 = scmp.eq.s32.totalorder %s10, 1
    %p116 = por %p114, %p115
    %p117 = scmp.ne.s32.totalorder %s109, %s112
    %p118 = scmp.eq.s32.totalorder %s10, 0
    %p119 = por %p117, %p118
    %p120 = scmp.ne.s32.totalorder %s109, %s112
    %p121 = scmp.eq.s32.totalorder %s15, 1
    %p122 = por %p120, %p121
    %p123 = scmp.ne.s32.totalorder %s112, %s113
    %p124 = scmp.eq.s32.totalorder %s15, 0
    %p125 = por %p123, %p124
    %p126 = scmp.ne.s32.totalorder %s112, %s113
    %p127 = scmp.eq.s32.totalorder %s16, 1
    %p128 = por %p126, %p127
    %p130 = scmp.ne.s32.totalorder %s113, %s129
    %p131 = scmp.eq.s32.totalorder %s16, 0
    %p132 = por %p130, %p131
    %p133 = scmp.le.s32.totalorder 1, %s10
    %p134 = scmp.lt.s32.totalorder %s10, 3
    %p135 = pnand %p133, %p134
    %p136 = pneg %p135
    // Predicated region
    $region9: #{tpu_custom_call.1} parent=5 // pred_check
      _
    $region10: #{tpu_custom_call.1} parent=5 // pred_check_branch
      %138 = sbr.rel (%p135) target = $region12
    $region11: #{tpu_custom_call.1} parent=5 // pred_region
      %s139 = ssub.s32 %s10, 1
      // Predicated region
      $region13: #{tpu_custom_call.1} parent=11 // pred_check
        %p140 = pneg %p57
      $region14: #{tpu_custom_call.1} parent=11 // pred_check_branch
        %142 = sbr.rel (%p140) target = $region16
      $region15: #{tpu_custom_call.1} parent=11 // pred_region
        _
      $region16: #{tpu_custom_call.1} parent=11 // pred_fallthru
        _
      // Predicated region
      $region17: #{tpu_custom_call.1} parent=11 // pred_check
        %p143 = pneg %p78
      $region18: #{tpu_custom_call.1} parent=11 // pred_check_branch
        %145 = sbr.rel (%p143) target = $region20
      $region19: #{tpu_custom_call.1} parent=11 // pred_region
        _
      $region20: #{tpu_custom_call.1} parent=11 // pred_fallthru
        _
      // Predicated region
      $region21: #{tpu_custom_call.1} parent=11 // pred_check
        %p146 = pneg %p99
      $region22: #{tpu_custom_call.1} parent=11 // pred_check_branch
        %148 = sbr.rel (%p146) target = $region24
      $region23: #{tpu_custom_call.1} parent=11 // pred_region
        _
      $region24: #{tpu_custom_call.1} parent=11 // pred_fallthru
        _
    $region12: #{tpu_custom_call.1} parent=5 // pred_fallthru
      _
    %p149 = scmp.lt.s32.totalorder %s10, 2
    // Predicated region
    $region25: #{tpu_custom_call.1} parent=5 // pred_check
      %p150 = pneg %p149
    $region26: #{tpu_custom_call.1} parent=5 // pred_check_branch
      %152 = sbr.rel (%p150) target = $region28
    $region27: #{tpu_custom_call.1} parent=5 // pred_region
      // Predicated region
      $region29: #{tpu_custom_call.1} parent=27 // pred_check
        %p153 = pneg %p30
      $region30: #{tpu_custom_call.1} parent=27 // pred_check_branch
        %155 = sbr.rel (%p153) target = $region32
      $region31: #{tpu_custom_call.1} parent=27 // pred_region
        %s156 = smul.u32 32, %s10
        %p157 = scmp.lt.s32.totalorder %s156, 63
        %s158 = scalar_select %p157, %s156, 63
        %s159 = smul.addr %s158, 4
        %s160 = scalar_lea.vmem %s0, %s159
        %s161 = smul.u32 32, %s10
      $region32: #{tpu_custom_call.1} parent=27 // pred_fallthru
        _
    $region28: #{tpu_custom_call.1} parent=5 // pred_fallthru
      _
    %p162 = scmp.le.s32.totalorder 1, %s10
    %p163 = scmp.lt.s32.totalorder %s10, 3
    %p164 = pnand %p162, %p163
    %p165 = pneg %p164
    // Predicated region
    $region33: #{tpu_custom_call.1} parent=5 // pred_check
      _
    $region34: #{tpu_custom_call.1} parent=5 // pred_check_branch
      %167 = sbr.rel (%p164) target = $region36
    $region35: #{tpu_custom_call.1} parent=5 // pred_region
      %s168 = ssub.s32 %s10, 1
      %s169 = smul.u32 32, %s15
      %p170 = scmp.lt.s32.totalorder %s169, 63
      %s171 = scalar_select %p170, %s169, 63
      %s172 = smul.addr %s171, 4
      %s173 = scalar_lea.vmem %s0, %s172
      %p174 = pneg %p36
      %p175 = pneg %p33
      %p176 = pneg %p57
      %p177 = pneg %p54
      %p178 = pneg %p78
      %p179 = pneg %p75
      %p180 = pneg %p99
      %p181 = pneg %p96
      %p182 = pneg %p125
      %p183 = pneg %p122
      %s184 = smul.u32 32, %s15
      %p185 = scmp.lt.s32.totalorder %s184, 63
      %s186 = scalar_select %p185, %s184, 63
      %s187 = smul.addr %s186, 4
      %s188 = scalar_lea.vmem %s4, %s187
      %s189 = smul.u32 32, %s15
      %p190 = scmp.lt.s32.totalorder %s189, 63
      %s191 = scalar_select %p190, %s189, 63
      %s192 = smul.addr %s191, 4
      %s193 = scalar_lea.vmem %s0, %s192
      %s194 = smul.u32 32, %s15
      %s195 = smul.u32 32, %s15
      %p196 = scmp.lt.s32.totalorder %s195, 63
      %s197 = scalar_select %p196, %s195, 63
      %s198 = smul.addr %s197, 4
      %s199 = scalar_lea.vmem %s4, %s198
      %s200 = smul.u32 32, %s15
      %v202 = vld [vmem:[%s193] sm:$0xf]
      %v203 = vld [vmem:[%s193 + $0x4] sm:$0xf]
      %v204 = vld [vmem:[%s193 + $0x8] sm:$0xf]
      %v205 = vld [vmem:[%s193 + $0xc] sm:$0xf]
      %v206 = vld [vmem:[%s193 + $0x10] sm:$0xf]
      %v207 = vld [vmem:[%s193 + $0x14] sm:$0xf]
      %v208 = vld [vmem:[%s193 + $0x18] sm:$0xf]
      %v209 = vld [vmem:[%s193 + $0x1c] sm:$0xf]
      %v210 = vld [vmem:[%s193 + $0x20] sm:$0xf]
      %v211 = vld [vmem:[%s193 + $0x24] sm:$0xf]
      %v212 = vld [vmem:[%s193 + $0x28] sm:$0xf]
      %v213 = vld [vmem:[%s193 + $0x2c] sm:$0xf]
      %v214 = vld [vmem:[%s193 + $0x30] sm:$0xf]
      %v215 = vld [vmem:[%s193 + $0x34] sm:$0xf]
      %v216 = vld [vmem:[%s193 + $0x38] sm:$0xf]
      %v217 = vld [vmem:[%s193 + $0x3c] sm:$0xf]
      %v218 = vld [vmem:[%s193 + $0x40] sm:$0xf]
      %v219 = vld [vmem:[%s193 + $0x44] sm:$0xf]
      %v220 = vld [vmem:[%s193 + $0x48] sm:$0xf]
      %v221 = vld [vmem:[%s193 + $0x4c] sm:$0xf]
      %v222 = vld [vmem:[%s193 + $0x50] sm:$0xf]
      %v223 = vld [vmem:[%s193 + $0x54] sm:$0xf]
      %v224 = vld [vmem:[%s193 + $0x58] sm:$0xf]
      %v225 = vld [vmem:[%s193 + $0x5c] sm:$0xf]
      %v226 = vld [vmem:[%s193 + $0x60] sm:$0xf]
      %v227 = vld [vmem:[%s193 + $0x64] sm:$0xf]
      %v228 = vld [vmem:[%s193 + $0x68] sm:$0xf]
      %v229 = vld [vmem:[%s193 + $0x6c] sm:$0xf]
      %v230 = vld [vmem:[%s193 + $0x70] sm:$0xf]
      %v231 = vld [vmem:[%s193 + $0x74] sm:$0xf]
      %v232 = vld [vmem:[%s193 + $0x78] sm:$0xf]
      %v233 = vld [vmem:[%s193 + $0x7c] sm:$0xf]
      %v234 = vld [vmem:[%s1] sm:$0xf]
      %v235 = vld [vmem:[%s1 + $0x4] sm:$0xf]
      %v236 = vld [vmem:[%s1 + $0x8] sm:$0xf]
      %v237 = vld [vmem:[%s1 + $0xc] sm:$0x3]
      %v270 = vunpack.c.l.b16 %v202
      %v271 = vunpack.c.l.b16 %v203
      %v272 = vunpack.c.l.b16 %v204
      %v273 = vunpack.c.l.b16 %v205
      %v274 = vunpack.c.l.b16 %v206
      %v275 = vunpack.c.l.b16 %v207
      %v276 = vunpack.c.l.b16 %v208
      %v277 = vunpack.c.l.b16 %v209
      %v278 = vunpack.c.l.b16 %v210
      %v279 = vunpack.c.l.b16 %v211
      %v280 = vunpack.c.l.b16 %v212
      %v281 = vunpack.c.l.b16 %v213
      %v282 = vunpack.c.l.b16 %v214
      %v283 = vunpack.c.l.b16 %v215
      %v284 = vunpack.c.l.b16 %v216
      %v285 = vunpack.c.l.b16 %v217
      %v286 = vunpack.c.l.b16 %v218
      %v287 = vunpack.c.l.b16 %v219
      %v288 = vunpack.c.l.b16 %v220
      %v289 = vunpack.c.l.b16 %v221
      %v290 = vunpack.c.l.b16 %v222
      %v291 = vunpack.c.l.b16 %v223
      %v292 = vunpack.c.l.b16 %v224
      %v293 = vunpack.c.l.b16 %v225
      %v294 = vunpack.c.l.b16 %v226
      %v295 = vunpack.c.l.b16 %v227
      %v296 = vunpack.c.l.b16 %v228
      %v297 = vunpack.c.l.b16 %v229
      %v298 = vunpack.c.l.b16 %v230
      %v299 = vunpack.c.l.b16 %v231
      %v300 = vunpack.c.l.b16 %v232
      %v301 = vunpack.c.l.b16 %v233
      %v302 = vpack.c.b16 %v271, %v270
      %v303 = vpack.c.b16 %v273, %v272
      %v304 = vpack.c.b16 %v275, %v274
      %v305 = vpack.c.b16 %v277, %v276
      %v306 = vpack.c.b16 %v279, %v278
      %v307 = vpack.c.b16 %v281, %v280
      %v308 = vpack.c.b16 %v283, %v282
      %v309 = vpack.c.b16 %v285, %v284
      %v310 = vpack.c.b16 %v287, %v286
      %v311 = vpack.c.b16 %v289, %v288
      %v312 = vpack.c.b16 %v291, %v290
      %v313 = vpack.c.b16 %v293, %v292
      %v314 = vpack.c.b16 %v295, %v294
      %v315 = vpack.c.b16 %v297, %v296
      %v316 = vpack.c.b16 %v299, %v298
      %v317 = vpack.c.b16 %v301, %v300
      %v322 = vunpack.c.l.b16 %v234
      %v323 = vunpack.c.l.b16 %v235
      %v324 = vunpack.c.l.b16 %v236
      %v325 = vunpack.c.l.b16 %v237
      %v326 = vpack.c.b16 %v323, %v322
      %v327 = vpack.c.b16 %v325, %v324
      %vm329 = vcmask 220160
      %v331 = vsel %vm329, %v302, 0
      %v334 = vsel %vm329, %v303, 0
      %v337 = vsel %vm329, %v304, 0
      %v340 = vsel %vm329, %v305, 0
      %v343 = vsel %vm329, %v306, 0
      %v346 = vsel %vm329, %v307, 0
      %v349 = vsel %vm329, %v308, 0
      %v352 = vsel %vm329, %v309, 0
      %v355 = vsel %vm329, %v310, 0
      %v358 = vsel %vm329, %v311, 0
      %v361 = vsel %vm329, %v312, 0
      %v364 = vsel %vm329, %v313, 0
      %v367 = vsel %vm329, %v314, 0
      %v370 = vsel %vm329, %v315, 0
      %v373 = vsel %vm329, %v316, 0
      %v376 = vsel %vm329, %v317, 0
      %vm378 = vcmask 1044480
      %vm379 = vcmask 1045504
      %v380 = vsel %vm378, 4294967295, 65535
      %v381 = vsel %vm379, %v380, 0
      %v383 = vand.u32 %v327, %v381
      %385 = vmatprep.subr.bf16.mxu0 0
      %386 = vmatpush1.bf16.msra.mxu0 %v326
      %387 = vmatprep.subr.bf16.mxu0 0
      %388 = vmatpush1.bf16.msra.mxu0 %v383
      %389 = vmatprep.subr.bf16.mxu0 0
      %390 = vmatpush1.bf16.msra.mxu0 0
      %391 = vmatprep.subr.bf16.mxu0 0
      %392 = vmatpush1.bf16.msra.mxu0 0
      %393 = vmatprep.subr.bf16.mxu0 0
      %394 = vmatpush1.bf16.msra.mxu0 0
      %395 = vmatprep.subr.bf16.mxu0 0
      %396 = vmatpush1.bf16.msra.mxu0 0
      %397 = vmatprep.subr.bf16.mxu0 0
      %398 = vmatpush1.bf16.msra.mxu0 0
      %399 = vmatprep.subr.bf16.mxu0 0
      %400 = vmatpush1.bf16.msra.mxu0 0
      %401 = vmatprep.subr.bf16.mxu0 0
      %402 = vmatpush1.bf16.msra.mxu0 0
      %403 = vmatprep.subr.bf16.mxu0 0
      %404 = vmatpush1.bf16.msra.mxu0 0
      %405 = vmatprep.subr.bf16.mxu0 0
      %406 = vmatpush1.bf16.msra.mxu0 0
      %407 = vmatprep.subr.bf16.mxu0 0
      %408 = vmatpush1.bf16.msra.mxu0 0
      %409 = vmatprep.subr.bf16.mxu0 0
      %410 = vmatpush1.bf16.msra.mxu0 0
      %411 = vmatprep.subr.bf16.mxu0 0
      %412 = vmatpush1.bf16.msra.mxu0 0
      %413 = vmatprep.subr.bf16.mxu0 0
      %414 = vmatpush1.bf16.msra.mxu0 0
      %415 = vmatprep.subr.bf16.mxu0 0
      %416 = vmatpush1.bf16.msra.mxu0 0
      %417 = vmatprep.mubr.bf16.mxu0 0
      %418 = vmatmul.mubr.bf16.gmra.mrb[0].mxu0 %v331
      %v419 = vpop.f32.mrb[0].mxu0
      %v420 = vadd.f32 0.0, %v419
      %v421 = vpop.f32.mrb[0].mxu0
      %v422 = vpop.f32.mrb[0].mxu0
      %v423 = vadd.f32 0.0, %v422
      %v424 = vpop.f32.mrb[0].mxu0
      %425 = vmatprep.mubr.bf16.mxu0 0
      %426 = vmatmul.mubr.bf16.gmra.mrb[0].mxu0 %v334
      %v427 = vpop.f32.mrb[0].mxu0
      %v428 = vadd.f32 0.0, %v427
      %v429 = vpop.f32.mrb[0].mxu0
      %v430 = vpop.f32.mrb[0].mxu0
      %v431 = vadd.f32 0.0, %v430
      %v432 = vpop.f32.mrb[0].mxu0
      %433 = vmatprep.mubr.bf16.mxu0 0
      %434 = vmatmul.mubr.bf16.gmra.mrb[0].mxu0 %v337
      %v435 = vpop.f32.mrb[0].mxu0
      %v436 = vadd.f32 0.0, %v435
      %v437 = vpop.f32.mrb[0].mxu0
      %v438 = vpop.f32.mrb[0].mxu0
      %v439 = vadd.f32 0.0, %v438
      %v440 = vpop.f32.mrb[0].mxu0
      %441 = vmatprep.mubr.bf16.mxu0 0
      %442 = vmatmul.mubr.bf16.gmra.mrb[0].mxu0 %v340
      %v443 = vpop.f32.mrb[0].mxu0
      %v444 = vadd.f32 0.0, %v443
      %v445 = vpop.f32.mrb[0].mxu0
      %v446 = vpop.f32.mrb[0].mxu0
      %v447 = vadd.f32 0.0, %v446
      %v448 = vpop.f32.mrb[0].mxu0
      %449 = vmatprep.mubr.bf16.mxu0 0
      %450 = vmatmul.mubr.bf16.gmra.mrb[0].mxu0 %v343
      %v451 = vpop.f32.mrb[0].mxu0
      %v452 = vadd.f32 0.0, %v451
      %v453 = vpop.f32.mrb[0].mxu0
      %v454 = vpop.f32.mrb[0].mxu0
      %v455 = vadd.f32 0.0, %v454
      %v456 = vpop.f32.mrb[0].mxu0
      %457 = vmatprep.mubr.bf16.mxu0 0
      %458 = vmatmul.mubr.bf16.gmra.mrb[0].mxu0 %v346
      %v459 = vpop.f32.mrb[0].mxu0
      %v460 = vadd.f32 0.0, %v459
      %v461 = vpop.f32.mrb[0].mxu0
      %v462 = vpop.f32.mrb[0].mxu0
      %v463 = vadd.f32 0.0, %v462
      %v464 = vpop.f32.mrb[0].mxu0
      %465 = vmatprep.mubr.bf16.mxu0 0
      %466 = vmatmul.mubr.bf16.gmra.mrb[0].mxu0 %v349
      %v467 = vpop.f32.mrb[0].mxu0
      %v468 = vadd.f32 0.0, %v467
      %v469 = vpop.f32.mrb[0].mxu0
      %v470 = vpop.f32.mrb[0].mxu0
      %v471 = vadd.f32 0.0, %v470
      %v472 = vpop.f32.mrb[0].mxu0
      %473 = vmatprep.mubr.bf16.mxu0 0
      %474 = vmatmul.mubr.bf16.gmra.mrb[0].mxu0 %v352
      %v475 = vpop.f32.mrb[0].mxu0
      %v476 = vadd.f32 0.0, %v475
      %v477 = vpop.f32.mrb[0].mxu0
      %v478 = vpop.f32.mrb[0].mxu0
      %v479 = vadd.f32 0.0, %v478
      %v480 = vpop.f32.mrb[0].mxu0
      %481 = vmatprep.mubr.bf16.mxu0 0
      %482 = vmatmul.mubr.bf16.gmra.mrb[0].mxu0 %v355
      %v483 = vpop.f32.mrb[0].mxu0
      %v484 = vadd.f32 0.0, %v483
      %v485 = vpop.f32.mrb[0].mxu0
      %v486 = vpop.f32.mrb[0].mxu0
      %v487 = vadd.f32 0.0, %v486
      %v488 = vpop.f32.mrb[0].mxu0
      %489 = vmatprep.mubr.bf16.mxu0 0
      %490 = vmatmul.mubr.bf16.gmra.mrb[0].mxu0 %v358
      %v491 = vpop.f32.mrb[0].mxu0
      %v492 = vadd.f32 0.0, %v491
      %v493 = vpop.f32.mrb[0].mxu0
      %v494 = vpop.f32.mrb[0].mxu0
      %v495 = vadd.f32 0.0, %v494
      %v496 = vpop.f32.mrb[0].mxu0
      %497 = vmatprep.mubr.bf16.mxu0 0
      %498 = vmatmul.mubr.bf16.gmra.mrb[0].mxu0 %v361
      %v499 = vpop.f32.mrb[0].mxu0
      %v500 = vadd.f32 0.0, %v499
      %v501 = vpop.f32.mrb[0].mxu0
      %v502 = vpop.f32.mrb[0].mxu0
      %v503 = vadd.f32 0.0, %v502
      %v504 = vpop.f32.mrb[0].mxu0
      %505 = vmatprep.mubr.bf16.mxu0 0
      %506 = vmatmul.mubr.bf16.gmra.mrb[0].mxu0 %v364
      %v507 = vpop.f32.mrb[0].mxu0
      %v508 = vadd.f32 0.0, %v507
      %v509 = vpop.f32.mrb[0].mxu0
      %v510 = vpop.f32.mrb[0].mxu0
      %v511 = vadd.f32 0.0, %v510
      %v512 = vpop.f32.mrb[0].mxu0
      %513 = vmatprep.mubr.bf16.mxu0 0
      %514 = vmatmul.mubr.bf16.gmra.mrb[0].mxu0 %v367
      %v515 = vpop.f32.mrb[0].mxu0
      %v516 = vadd.f32 0.0, %v515
      %v517 = vpop.f32.mrb[0].mxu0
      %v518 = vpop.f32.mrb[0].mxu0
      %v519 = vadd.f32 0.0, %v518
      %v520 = vpop.f32.mrb[0].mxu0
      %521 = vmatprep.mubr.bf16.mxu0 0
      %522 = vmatmul.mubr.bf16.gmra.mrb[0].mxu0 %v370
      %v523 = vpop.f32.mrb[0].mxu0
      %v524 = vadd.f32 0.0, %v523
      %v525 = vpop.f32.mrb[0].mxu0
      %v526 = vpop.f32.mrb[0].mxu0
      %v527 = vadd.f32 0.0, %v526
      %v528 = vpop.f32.mrb[0].mxu0
      %529 = vmatprep.mubr.bf16.mxu0 0
      %530 = vmatmul.mubr.bf16.gmra.mrb[0].mxu0 %v373
      %v531 = vpop.f32.mrb[0].mxu0
      %v532 = vadd.f32 0.0, %v531
      %v533 = vpop.f32.mrb[0].mxu0
      %v534 = vpop.f32.mrb[0].mxu0
      %v535 = vadd.f32 0.0, %v534
      %v536 = vpop.f32.mrb[0].mxu0
      %537 = vmatprep.mubr.bf16.mxu0 0
      %538 = vmatmul.mubr.bf16.gmra.mrb[0].mxu0 %v376
      %v539 = vpop.f32.mrb[0].mxu0
      %v540 = vadd.f32 0.0, %v539
      %v541 = vpop.f32.mrb[0].mxu0
      %v542 = vpop.f32.mrb[0].mxu0
      %v543 = vadd.f32 0.0, %v542
      %v544 = vpop.f32.mrb[0].mxu0
      %545 = vdwg.mxu0
      %v546 = vld [vmem:[%s2] sm:$0x1]
      %v548 = vlaneseq
      %v549 = vshrl.u32 %v548, 7
      %v550 = vsub.s32 0, %v549
      %v551 = vrot.slane %v546, %v550
      %v553 = vmul.f32 %v420, %v551
      %v554 = vmul.f32 %v423, %v551
      %v555 = vmul.f32 %v428, %v551
      %v556 = vmul.f32 %v431, %v551
      %v557 = vmul.f32 %v436, %v551
      %v558 = vmul.f32 %v439, %v551
      %v559 = vmul.f32 %v444, %v551
      %v560 = vmul.f32 %v447, %v551
      %v561 = vmul.f32 %v452, %v551
      %v562 = vmul.f32 %v455, %v551
      %v563 = vmul.f32 %v460, %v551
      %v564 = vmul.f32 %v463, %v551
      %v565 = vmul.f32 %v468, %v551
      %v566 = vmul.f32 %v471, %v551
      %v567 = vmul.f32 %v476, %v551
      %v568 = vmul.f32 %v479, %v551
      %v569 = vmul.f32 %v484, %v551
      %v570 = vmul.f32 %v487, %v551
      %v571 = vmul.f32 %v492, %v551
      %v572 = vmul.f32 %v495, %v551
      %v573 = vmul.f32 %v500, %v551
      %v574 = vmul.f32 %v503, %v551
      %v575 = vmul.f32 %v508, %v551
      %v576 = vmul.f32 %v511, %v551
      %v577 = vmul.f32 %v516, %v551
      %v578 = vmul.f32 %v519, %v551
      %v579 = vmul.f32 %v524, %v551
      %v580 = vmul.f32 %v527, %v551
      %v581 = vmul.f32 %v532, %v551
      %v582 = vmul.f32 %v535, %v551
      %v583 = vmul.f32 %v540, %v551
      %v584 = vmul.f32 %v543, %v551
      %v585 = vld [vmem:[%s3] sm:$0x1]
      %v587 = vlaneseq
      %v588 = vshrl.u32 %v587, 7
      %v589 = vsub.s32 0, %v588
      %v590 = vrot.slane %v585, %v589
      %v592 = vadd.f32 %v553, %v590
      %v593 = vadd.f32 %v554, %v590
      %v594 = vadd.f32 %v555, %v590
      %v595 = vadd.f32 %v556, %v590
      %v596 = vadd.f32 %v557, %v590
      %v597 = vadd.f32 %v558, %v590
      %v598 = vadd.f32 %v559, %v590
      %v599 = vadd.f32 %v560, %v590
      %v600 = vadd.f32 %v561, %v590
      %v601 = vadd.f32 %v562, %v590
      %v602 = vadd.f32 %v563, %v590
      %v603 = vadd.f32 %v564, %v590
      %v604 = vadd.f32 %v565, %v590
      %v605 = vadd.f32 %v566, %v590
      %v606 = vadd.f32 %v567, %v590
      %v607 = vadd.f32 %v568, %v590
      %v608 = vadd.f32 %v569, %v590
      %v609 = vadd.f32 %v570, %v590
      %v610 = vadd.f32 %v571, %v590
      %v611 = vadd.f32 %v572, %v590
      %v612 = vadd.f32 %v573, %v590
      %v613 = vadd.f32 %v574, %v590
      %v614 = vadd.f32 %v575, %v590
      %v615 = vadd.f32 %v576, %v590
      %v616 = vadd.f32 %v577, %v590
      %v617 = vadd.f32 %v578, %v590
      %v618 = vadd.f32 %v579, %v590
      %v619 = vadd.f32 %v580, %v590
      %v620 = vadd.f32 %v581, %v590
      %v621 = vadd.f32 %v582, %v590
      %v622 = vadd.f32 %v583, %v590
      %v623 = vadd.f32 %v584, %v590
      %v624 = vxor.u32 %v592, 2147483648
      %v625 = vxor.u32 %v593, 2147483648
      %v626 = vxor.u32 %v594, 2147483648
      %v627 = vxor.u32 %v595, 2147483648
      %v628 = vxor.u32 %v596, 2147483648
      %v629 = vxor.u32 %v597, 2147483648
      %v630 = vxor.u32 %v598, 2147483648
      %v631 = vxor.u32 %v599, 2147483648
      %v632 = vxor.u32 %v600, 2147483648
      %v633 = vxor.u32 %v601, 2147483648
      %v634 = vxor.u32 %v602, 2147483648
      %v635 = vxor.u32 %v603, 2147483648
      %v636 = vxor.u32 %v604, 2147483648
      %v637 = vxor.u32 %v605, 2147483648
      %v638 = vxor.u32 %v606, 2147483648
      %v639 = vxor.u32 %v607, 2147483648
      %v640 = vxor.u32 %v608, 2147483648
      %v641 = vxor.u32 %v609, 2147483648
      %v642 = vxor.u32 %v610, 2147483648
      %v643 = vxor.u32 %v611, 2147483648
      %v644 = vxor.u32 %v612, 2147483648
      %v645 = vxor.u32 %v613, 2147483648
      %v646 = vxor.u32 %v614, 2147483648
      %v647 = vxor.u32 %v615, 2147483648
      %v648 = vxor.u32 %v616, 2147483648
      %v649 = vxor.u32 %v617, 2147483648
      %v650 = vxor.u32 %v618, 2147483648
      %v651 = vxor.u32 %v619, 2147483648
      %v652 = vxor.u32 %v620, 2147483648
      %v653 = vxor.u32 %v621, 2147483648
      %v654 = vxor.u32 %v622, 2147483648
      %v655 = vxor.u32 %v623, 2147483648
      %v656 = vmul.f32 %v624, 1.442695
      %v657 = vpow.pop %v656
      %v658 = vmul.f32 %v625, 1.442695
      %v659 = vpow.pop %v658
      %v660 = vmul.f32 %v626, 1.442695
      %v661 = vpow.pop %v660
      %v662 = vmul.f32 %v627, 1.442695
      %v663 = vpow.pop %v662
      %v664 = vmul.f32 %v628, 1.442695
      %v665 = vpow.pop %v664
      %v666 = vmul.f32 %v629, 1.442695
      %v667 = vpow.pop %v666
      %v668 = vmul.f32 %v630, 1.442695
      %v669 = vpow.pop %v668
      %v670 = vmul.f32 %v631, 1.442695
      %v671 = vpow.pop %v670
      %v672 = vmul.f32 %v632, 1.442695
      %v673 = vpow.pop %v672
      %v674 = vmul.f32 %v633, 1.442695
      %v675 = vpow.pop %v674
      %v676 = vmul.f32 %v634, 1.442695
      %v677 = vpow.pop %v676
      %v678 = vmul.f32 %v635, 1.442695
      %v679 = vpow.pop %v678
      %v680 = vmul.f32 %v636, 1.442695
      %v681 = vpow.pop %v680
      %v682 = vmul.f32 %v637, 1.442695
      %v683 = vpow.pop %v682
      %v684 = vmul.f32 %v638, 1.442695
      %v685 = vpow.pop %v684
      %v686 = vmul.f32 %v639, 1.442695
      %v687 = vpow.pop %v686
      %v688 = vmul.f32 %v640, 1.442695
      %v689 = vpow.pop %v688
      %v690 = vmul.f32 %v641, 1.442695
      %v691 = vpow.pop %v690
      %v692 = vmul.f32 %v642, 1.442695
      %v693 = vpow.pop %v692
      %v694 = vmul.f32 %v643, 1.442695
      %v695 = vpow.pop %v694
      %v696 = vmul.f32 %v644, 1.442695
      %v697 = vpow.pop %v696
      %v698 = vmul.f32 %v645, 1.442695
      %v699 = vpow.pop %v698
      %v700 = vmul.f32 %v646, 1.442695
      %v701 = vpow.pop %v700
      %v702 = vmul.f32 %v647, 1.442695
      %v703 = vpow.pop %v702
      %v704 = vmul.f32 %v648, 1.442695
      %v705 = vpow.pop %v704
      %v706 = vmul.f32 %v649, 1.442695
      %v707 = vpow.pop %v706
      %v708 = vmul.f32 %v650, 1.442695
      %v709 = vpow.pop %v708
      %v710 = vmul.f32 %v651, 1.442695
      %v711 = vpow.pop %v710
      %v712 = vmul.f32 %v652, 1.442695
      %v713 = vpow.pop %v712
      %v714 = vmul.f32 %v653, 1.442695
      %v715 = vpow.pop %v714
      %v716 = vmul.f32 %v654, 1.442695
      %v717 = vpow.pop %v716
      %v718 = vmul.f32 %v655, 1.442695
      %v719 = vpow.pop %v718
      %v720 = vadd.f32 %v657, 1.0
      %v721 = vadd.f32 %v659, 1.0
      %v722 = vadd.f32 %v661, 1.0
      %v723 = vadd.f32 %v663, 1.0
      %v724 = vadd.f32 %v665, 1.0
      %v725 = vadd.f32 %v667, 1.0
      %v726 = vadd.f32 %v669, 1.0
      %v727 = vadd.f32 %v671, 1.0
      %v728 = vadd.f32 %v673, 1.0
      %v729 = vadd.f32 %v675, 1.0
      %v730 = vadd.f32 %v677, 1.0
      %v731 = vadd.f32 %v679, 1.0
      %v732 = vadd.f32 %v681, 1.0
      %v733 = vadd.f32 %v683, 1.0
      %v734 = vadd.f32 %v685, 1.0
      %v735 = vadd.f32 %v687, 1.0
      %v736 = vadd.f32 %v689, 1.0
      %v737 = vadd.f32 %v691, 1.0
      %v738 = vadd.f32 %v693, 1.0
      %v739 = vadd.f32 %v695, 1.0
      %v740 = vadd.f32 %v697, 1.0
      %v741 = vadd.f32 %v699, 1.0
      %v742 = vadd.f32 %v701, 1.0
      %v743 = vadd.f32 %v703, 1.0
      %v744 = vadd.f32 %v705, 1.0
      %v745 = vadd.f32 %v707, 1.0
      %v746 = vadd.f32 %v709, 1.0
      %v747 = vadd.f32 %v711, 1.0
      %v748 = vadd.f32 %v713, 1.0
      %v749 = vadd.f32 %v715, 1.0
      %v750 = vadd.f32 %v717, 1.0
      %v751 = vadd.f32 %v719, 1.0
      %v752 = vrcp.pop %v720
      %v753 = vmul.f32 1.0, %v752
      %v754 = vrcp.pop %v721
      %v755 = vmul.f32 1.0, %v754
      %v756 = vrcp.pop %v722
      %v757 = vmul.f32 1.0, %v756
      %v758 = vrcp.pop %v723
      %v759 = vmul.f32 1.0, %v758
      %v760 = vrcp.pop %v724
      %v761 = vmul.f32 1.0, %v760
      %v762 = vrcp.pop %v725
      %v763 = vmul.f32 1.0, %v762
      %v764 = vrcp.pop %v726
      %v765 = vmul.f32 1.0, %v764
      %v766 = vrcp.pop %v727
      %v767 = vmul.f32 1.0, %v766
      %v768 = vrcp.pop %v728
      %v769 = vmul.f32 1.0, %v768
      %v770 = vrcp.pop %v729
      %v771 = vmul.f32 1.0, %v770
      %v772 = vrcp.pop %v730
      %v773 = vmul.f32 1.0, %v772
      %v774 = vrcp.pop %v731
      %v775 = vmul.f32 1.0, %v774
      %v776 = vrcp.pop %v732
      %v777 = vmul.f32 1.0, %v776
      %v778 = vrcp.pop %v733
      %v779 = vmul.f32 1.0, %v778
      %v780 = vrcp.pop %v734
      %v781 = vmul.f32 1.0, %v780
      %v782 = vrcp.pop %v735
      %v783 = vmul.f32 1.0, %v782
      %v784 = vrcp.pop %v736
      %v785 = vmul.f32 1.0, %v784
      %v786 = vrcp.pop %v737
      %v787 = vmul.f32 1.0, %v786
      %v788 = vrcp.pop %v738
      %v789 = vmul.f32 1.0, %v788
      %v790 = vrcp.pop %v739
      %v791 = vmul.f32 1.0, %v790
      %v792 = vrcp.pop %v740
      %v793 = vmul.f32 1.0, %v792
      %v794 = vrcp.pop %v741
      %v795 = vmul.f32 1.0, %v794
      %v796 = vrcp.pop %v742
      %v797 = vmul.f32 1.0, %v796
      %v798 = vrcp.pop %v743
      %v799 = vmul.f32 1.0, %v798
      %v800 = vrcp.pop %v744
      %v801 = vmul.f32 1.0, %v800
      %v802 = vrcp.pop %v745
      %v803 = vmul.f32 1.0, %v802
      %v804 = vrcp.pop %v746
      %v805 = vmul.f32 1.0, %v804
      %v806 = vrcp.pop %v747
      %v807 = vmul.f32 1.0, %v806
      %v808 = vrcp.pop %v748
      %v809 = vmul.f32 1.0, %v808
      %v810 = vrcp.pop %v749
      %v811 = vmul.f32 1.0, %v810
      %v812 = vrcp.pop %v750
      %v813 = vmul.f32 1.0, %v812
      %v814 = vrcp.pop %v751
      %v815 = vmul.f32 1.0, %v814
      %v816 = vmul.f32 %v592, %v753
      %v817 = vmul.f32 %v593, %v755
      %v818 = vmul.f32 %v594, %v757
      %v819 = vmul.f32 %v595, %v759
      %v820 = vmul.f32 %v596, %v761
      %v821 = vmul.f32 %v597, %v763
      %v822 = vmul.f32 %v598, %v765
      %v823 = vmul.f32 %v599, %v767
      %v824 = vmul.f32 %v600, %v769
      %v825 = vmul.f32 %v601, %v771
      %v826 = vmul.f32 %v602, %v773
      %v827 = vmul.f32 %v603, %v775
      %v828 = vmul.f32 %v604, %v777
      %v829 = vmul.f32 %v605, %v779
      %v830 = vmul.f32 %v606, %v781
      %v831 = vmul.f32 %v607, %v783
      %v832 = vmul.f32 %v608, %v785
      %v833 = vmul.f32 %v609, %v787
      %v834 = vmul.f32 %v610, %v789
      %v835 = vmul.f32 %v611, %v791
      %v836 = vmul.f32 %v612, %v793
      %v837 = vmul.f32 %v613, %v795
      %v838 = vmul.f32 %v614, %v797
      %v839 = vmul.f32 %v615, %v799
      %v840 = vmul.f32 %v616, %v801
      %v841 = vmul.f32 %v617, %v803
      %v842 = vmul.f32 %v618, %v805
      %v843 = vmul.f32 %v619, %v807
      %v844 = vmul.f32 %v620, %v809
      %v845 = vmul.f32 %v621, %v811
      %v846 = vmul.f32 %v622, %v813
      %v847 = vmul.f32 %v623, %v815
      %v848 = vpack.c.bf16 %v817, %v816
      %v849 = vpack.c.bf16 %v819, %v818
      %v850 = vpack.c.bf16 %v821, %v820
      %v851 = vpack.c.bf16 %v823, %v822
      %v852 = vpack.c.bf16 %v825, %v824
      %v853 = vpack.c.bf16 %v827, %v826
      %v854 = vpack.c.bf16 %v829, %v828
      %v855 = vpack.c.bf16 %v831, %v830
      %v856 = vpack.c.bf16 %v833, %v832
      %v857 = vpack.c.bf16 %v835, %v834
      %v858 = vpack.c.bf16 %v837, %v836
      %v859 = vpack.c.bf16 %v839, %v838
      %v860 = vpack.c.bf16 %v841, %v840
      %v861 = vpack.c.bf16 %v843, %v842
      %v862 = vpack.c.bf16 %v845, %v844
      %v863 = vpack.c.bf16 %v847, %v846
      %v880 = vunpack.c.l.b16 %v848
      %v881 = vunpack.c.h.b16 %v848
      %v882 = vunpack.c.l.b16 %v849
      %v883 = vunpack.c.h.b16 %v849
      %v884 = vunpack.c.l.b16 %v850
      %v885 = vunpack.c.h.b16 %v850
      %v886 = vunpack.c.l.b16 %v851
      %v887 = vunpack.c.h.b16 %v851
      %v888 = vunpack.c.l.b16 %v852
      %v889 = vunpack.c.h.b16 %v852
      %v890 = vunpack.c.l.b16 %v853
      %v891 = vunpack.c.h.b16 %v853
      %v892 = vunpack.c.l.b16 %v854
      %v893 = vunpack.c.h.b16 %v854
      %v894 = vunpack.c.l.b16 %v855
      %v895 = vunpack.c.h.b16 %v855
      %v896 = vunpack.c.l.b16 %v856
      %v897 = vunpack.c.h.b16 %v856
      %v898 = vunpack.c.l.b16 %v857
      %v899 = vunpack.c.h.b16 %v857
      %v900 = vunpack.c.l.b16 %v858
      %v901 = vunpack.c.h.b16 %v858
      %v902 = vunpack.c.l.b16 %v859
      %v903 = vunpack.c.h.b16 %v859
      %v904 = vunpack.c.l.b16 %v860
      %v905 = vunpack.c.h.b16 %v860
      %v906 = vunpack.c.l.b16 %v861
      %v907 = vunpack.c.h.b16 %v861
      %v908 = vunpack.c.l.b16 %v862
      %v909 = vunpack.c.h.b16 %v862
      %v910 = vunpack.c.l.b16 %v863
      %v911 = vunpack.c.h.b16 %v863
      %v912 = vpack.c.b16 %v880, %v880
      %v913 = vpack.c.b16 %v881, %v881
      %v914 = vpack.c.b16 %v882, %v882
      %v915 = vpack.c.b16 %v883, %v883
      %v916 = vpack.c.b16 %v884, %v884
      %v917 = vpack.c.b16 %v885, %v885
      %v918 = vpack.c.b16 %v886, %v886
      %v919 = vpack.c.b16 %v887, %v887
      %v920 = vpack.c.b16 %v888, %v888
      %v921 = vpack.c.b16 %v889, %v889
      %v922 = vpack.c.b16 %v890, %v890
      %v923 = vpack.c.b16 %v891, %v891
      %v924 = vpack.c.b16 %v892, %v892
      %v925 = vpack.c.b16 %v893, %v893
      %v926 = vpack.c.b16 %v894, %v894
      %v927 = vpack.c.b16 %v895, %v895
      %v928 = vpack.c.b16 %v896, %v896
      %v929 = vpack.c.b16 %v897, %v897
      %v930 = vpack.c.b16 %v898, %v898
      %v931 = vpack.c.b16 %v899, %v899
      %v932 = vpack.c.b16 %v900, %v900
      %v933 = vpack.c.b16 %v901, %v901
      %v934 = vpack.c.b16 %v902, %v902
      %v935 = vpack.c.b16 %v903, %v903
      %v936 = vpack.c.b16 %v904, %v904
      %v937 = vpack.c.b16 %v905, %v905
      %v938 = vpack.c.b16 %v906, %v906
      %v939 = vpack.c.b16 %v907, %v907
      %v940 = vpack.c.b16 %v908, %v908
      %v941 = vpack.c.b16 %v909, %v909
      %v942 = vpack.c.b16 %v910, %v910
      %v943 = vpack.c.b16 %v911, %v911
      %vm976 = vcmask 257024
      %977 = vst.msk [vmem:[%s199] sm:$0xf] %vm976, %v912
      %978 = vst.msk [vmem:[%s199 + $0x4] sm:$0xf] %vm976, %v913
      %979 = vst.msk [vmem:[%s199 + $0x8] sm:$0xf] %vm976, %v914
      %980 = vst.msk [vmem:[%s199 + $0xc] sm:$0xf] %vm976, %v915
      %981 = vst.msk [vmem:[%s199 + $0x10] sm:$0xf] %vm976, %v916
      %982 = vst.msk [vmem:[%s199 + $0x14] sm:$0xf] %vm976, %v917
      %983 = vst.msk [vmem:[%s199 + $0x18] sm:$0xf] %vm976, %v918
      %984 = vst.msk [vmem:[%s199 + $0x1c] sm:$0xf] %vm976, %v919
      %985 = vst.msk [vmem:[%s199 + $0x20] sm:$0xf] %vm976, %v920
      %986 = vst.msk [vmem:[%s199 + $0x24] sm:$0xf] %vm976, %v921
      %987 = vst.msk [vmem:[%s199 + $0x28] sm:$0xf] %vm976, %v922
      %988 = vst.msk [vmem:[%s199 + $0x2c] sm:$0xf] %vm976, %v923
      %989 = vst.msk [vmem:[%s199 + $0x30] sm:$0xf] %vm976, %v924
      %990 = vst.msk [vmem:[%s199 + $0x34] sm:$0xf] %vm976, %v925
      %991 = vst.msk [vmem:[%s199 + $0x38] sm:$0xf] %vm976, %v926
      %992 = vst.msk [vmem:[%s199 + $0x3c] sm:$0xf] %vm976, %v927
      %993 = vst.msk [vmem:[%s199 + $0x40] sm:$0xf] %vm976, %v928
      %994 = vst.msk [vmem:[%s199 + $0x44] sm:$0xf] %vm976, %v929
      %995 = vst.msk [vmem:[%s199 + $0x48] sm:$0xf] %vm976, %v930
      %996 = vst.msk [vmem:[%s199 + $0x4c] sm:$0xf] %vm976, %v931
      %997 = vst.msk [vmem:[%s199 + $0x50] sm:$0xf] %vm976, %v932
      %998 = vst.msk [vmem:[%s199 + $0x54] sm:$0xf] %vm976, %v933
      %999 = vst.msk [vmem:[%s199 + $0x58] sm:$0xf] %vm976, %v934
      %1000 = vst.msk [vmem:[%s199 + $0x5c] sm:$0xf] %vm976, %v935
      %1001 = vst.msk [vmem:[%s199 + $0x60] sm:$0xf] %vm976, %v936
      %1002 = vst.msk [vmem:[%s199 + $0x64] sm:$0xf] %vm976, %v937
      %1003 = vst.msk [vmem:[%s199 + $0x68] sm:$0xf] %vm976, %v938
      %1004 = vst.msk [vmem:[%s199 + $0x6c] sm:$0xf] %vm976, %v939
      %1005 = vst.msk [vmem:[%s199 + $0x70] sm:$0xf] %vm976, %v940
      %1006 = vst.msk [vmem:[%s199 + $0x74] sm:$0xf] %vm976, %v941
      %1007 = vst.msk [vmem:[%s199 + $0x78] sm:$0xf] %vm976, %v942
      %1008 = vst.msk [vmem:[%s199 + $0x7c] sm:$0xf] %vm976, %v943
      %s1009 = smul.u32 32, %s15
      %p1010 = scmp.lt.s32.totalorder %s1009, 63
      %s1011 = scalar_select %p1010, %s1009, 63
      %s1012 = smul.addr %s1011, 4
      %s1013 = scalar_lea.vmem %s4, %s1012
      // Predicated region
      $region37: #{tpu_custom_call.1} parent=35 // pred_check
        %p1014 = pneg %p122
      $region38: #{tpu_custom_call.1} parent=35 // pred_check_branch
        %1016 = sbr.rel (%p1014) target = $region40
      $region39: #{tpu_custom_call.1} parent=35 // pred_region
        %s1017 = smul.u32 32, %s15
      $region40: #{tpu_custom_call.1} parent=35 // pred_fallthru
        _
    $region36: #{tpu_custom_call.1} parent=5 // pred_fallthru
      _
    %p1018 = scmp.le.s32.totalorder 2, %s10
    // Predicated region
    $region41: #{tpu_custom_call.1} parent=5 // pred_check
      %p1019 = pneg %p1018
    $region42: #{tpu_custom_call.1} parent=5 // pred_check_branch
      %1021 = sbr.rel (%p1019) target = $region44
    $region43: #{tpu_custom_call.1} parent=5 // pred_region
      %s1022 = ssub.s32 %s10, 2
      // Predicated region
      $region45: #{tpu_custom_call.1} parent=43 // pred_check
        %p1023 = pneg %p128
      $region46: #{tpu_custom_call.1} parent=43 // pred_check_branch
        %1025 = sbr.rel (%p1023) target = $region48
      $region47: #{tpu_custom_call.1} parent=43 // pred_region
        %s1026 = smul.u32 32, %s16
        %p1027 = scmp.lt.s32.totalorder %s1026, 63
        %s1028 = scalar_select %p1027, %s1026, 63
        %s1029 = smul.addr %s1028, 4
        %s1030 = scalar_lea.vmem %s4, %s1029
      $region48: #{tpu_custom_call.1} parent=43 // pred_fallthru
        _
    $region44: #{tpu_custom_call.1} parent=5 // pred_fallthru
      _
  $region6: #{tpu_custom_call.1} parent=0 // loop_footer
    %s14 = sadd.s32 1, %s10
  $region7: #{tpu_custom_call.1} parent=0 // loop_footer_branch
    %9 = sbr.rel target = $region3
  $region8: #{tpu_custom_call.1} parent=0 // loop_exit
    _

</llo_original>
